<compile_context>
chip_gen: v5e
topology: v5e:2x2
jax: 0.10.0
libtpu: 0.0.40
codegen_flags: <defaults>
</compile_context>

<pallas_src>
import functools

import jax
import jax.numpy as jnp
from jax.experimental import pallas as pl
from jax.experimental.pallas import tpu as pltpu

EPS = 1e-5
_VMEM_LIMIT_BYTES = 48 * 1024 * 1024      # above default scoped limit, < v7x physical
_X_BLOCK_BYTES_CAP = 4 * 1024 * 1024      # per-x-block budget (f32 accounting)


def _pick_tile_hw(hw: int, c: int) -> int:
    """Largest lane-dense (multiple-of-128) divisor of `hw` under the VMEM budget,
    or `hw` itself when it already fits / no such divisor exists."""
    cap = max(128, _X_BLOCK_BYTES_CAP // (max(c, 1) * 4))
    if hw <= cap:
        return hw
    t = (cap // 128) * 128
    while t >= 128:
        if hw % t == 0:
            return t
        t -= 128
    return hw  # fallback: single (possibly large) block along HW


def _stats_kernel(x_ref, sum_ref, sumsq_ref):
    # x_ref:     (1, C, TILE_HW)  input block
    # sum_ref:   (1, C, 1) f32    per-(n, channel) sum       (resident across hw axis)
    # sumsq_ref: (1, C, 1) f32    per-(n, channel) sum(x^2)  (resident across hw axis)
    @pl.when(pl.program_id(1) == 0)
    def _init():
        sum_ref[...] = jnp.zeros_like(sum_ref)
        sumsq_ref[...] = jnp.zeros_like(sumsq_ref)

    x = x_ref[0].astype(jnp.float32)                       # (C, TILE_HW)
    sum_ref[0] += jnp.sum(x, axis=1, keepdims=True)        # (C, 1)
    sumsq_ref[0] += jnp.sum(x * x, axis=1, keepdims=True)  # (C, 1)


def _normalize_kernel(x_ref, scale_ref, shift_ref, o_ref):
    # x_ref/o_ref: (1, C, TILE_HW); scale_ref/shift_ref: (C, 1) f32
    y = x_ref[0] * scale_ref[...] + shift_ref[...]         # fused per-channel FMA
    o_ref[0] = y.astype(o_ref.dtype)


@functools.partial(jax.jit, static_argnames=("tile_hw",))
def fixed_reduction_forward(x_nchw, gamma, beta, *, tile_hw=None):
    """BatchNorm2d forward (training-mode batch stats) via Pallas TPU kernels.

    x_nchw: (N, C, H, W); gamma, beta: (C,).  Returns (N, C, H, W), dtype of x.
    """
    N, C, H, W = x_nchw.shape
    HW = H * W
    M = N * HW

    if tile_hw is None:
        tile_hw = _pick_tile_hw(HW, C)
    assert HW % tile_hw == 0, "tile_hw must divide H*W"
    assert tile_hw == HW or tile_hw % 128 == 0, "tile_hw must be lane-dense"
    num_hw = HW // tile_hw

    # Free, contiguous view: no transpose, HW on the lane axis.
    x3d = x_nchw.reshape(N, C, HW)

    # ---------------- Pass 1: per-(n, channel) partial sums ----------------
    sum_out, sumsq_out = pl.pallas_call(
        _stats_kernel,
        out_shape=(
            jax.ShapeDtypeStruct((N, C, 1), jnp.float32),
            jax.ShapeDtypeStruct((N, C, 1), jnp.float32),
        ),
        grid=(N, num_hw),
        in_specs=[pl.BlockSpec((1, C, tile_hw), lambda n, t: (n, 0, t))],
        out_specs=(
            pl.BlockSpec((1, C, 1), lambda n, t: (n, 0, 0)),
            pl.BlockSpec((1, C, 1), lambda n, t: (n, 0, 0)),
        ),
        compiler_params=pltpu.CompilerParams(
            dimension_semantics=("parallel", "arbitrary"),
            vmem_limit_bytes=_VMEM_LIMIT_BYTES,
        ),
    )(x3d)

    # ------- Tiny per-channel combine; fold gamma/beta into scale/shift -------
    sums = jnp.sum(sum_out, axis=0)[:, 0]      # (C,)
    sumsqs = jnp.sum(sumsq_out, axis=0)[:, 0]  # (C,)
    inv_m = 1.0 / float(M)
    mean = sums * inv_m
    var = jnp.maximum(sumsqs * inv_m - mean * mean, 0.0)   # biased var, clamped
    inv_std = jax.lax.rsqrt(var + EPS)
    scale = gamma.astype(jnp.float32) * inv_std            # (C,)
    shift = beta.astype(jnp.float32) - mean * scale        # (C,)
    scale2d = scale.reshape(C, 1)
    shift2d = shift.reshape(C, 1)

    # ---------------- Pass 2: elementwise y = x * scale + shift ----------------
    y3d = pl.pallas_call(
        _normalize_kernel,
        out_shape=jax.ShapeDtypeStruct((N, C, HW), x_nchw.dtype),
        grid=(N, num_hw),
        in_specs=[
            pl.BlockSpec((1, C, tile_hw), lambda n, t: (n, 0, t)),
            pl.BlockSpec((C, 1), lambda n, t: (0, 0)),
            pl.BlockSpec((C, 1), lambda n, t: (0, 0)),
        ],
        out_specs=pl.BlockSpec((1, C, tile_hw), lambda n, t: (n, 0, t)),
        compiler_params=pltpu.CompilerParams(
            dimension_semantics=("parallel", "parallel"),
            vmem_limit_bytes=_VMEM_LIMIT_BYTES,
        ),
    )(x3d, scale2d, shift2d)

    return y3d.reshape(N, C, H, W)


def _reference(x_nchw, gamma, beta):
    """Pure-JAX reference (matches torch.nn.BatchNorm2d training forward)."""
    x = x_nchw.astype(jnp.float32)
    mean = jnp.mean(x, axis=(0, 2, 3), keepdims=True)
    var = jnp.mean((x - mean) ** 2, axis=(0, 2, 3), keepdims=True)
    g = gamma.reshape(1, -1, 1, 1).astype(jnp.float32)
    b = beta.reshape(1, -1, 1, 1).astype(jnp.float32)
    return ((x - mean) * jax.lax.rsqrt(var + EPS) * g + b).astype(x_nchw.dtype)


# TODO(synk): running_mean / running_var buffer updates (training-state side effect
# of nn.BatchNorm2d) are not emitted; only the forward output is computed.

if __name__ == "__main__":
    key = jax.random.PRNGKey(0)
    N, C, H, W = 2, 4, 16, 16            # x: [2, 4, 16, 16], input_dim = 4

    x = jax.random.normal(key, (N, C, H, W), dtype=jnp.float32)

    # nn.BatchNorm2d default init: weight (gamma) = 1, bias (beta) = 0.
    gamma = jnp.ones((C,), dtype=jnp.float32)
    beta = jnp.zeros((C,), dtype=jnp.float32)

    ref = _reference(x, gamma, beta)

    # Default (auto-picked) tiling: single lane-dense block along HW.
    out = jax.block_until_ready(fixed_reduction_forward(x, gamma, beta))
    assert out.shape == (N, C, H, W)
    assert jnp.max(jnp.abs(out - ref)) < 1e-4

    # Force multiple HW tiles to exercise the grid-accumulation path.
    out_tiled = jax.block_until_ready(
        fixed_reduction_forward(x, gamma, beta, tile_hw=128))
    assert jnp.max(jnp.abs(out_tiled - ref)) < 1e-4

    print("KERNEL_OK")
</pallas_src>

<mosaic_0001>
module attributes {stable_mosaic.version = 11 : i64} {
  func.func @_stats_kernel(%arg0: i32, %arg1: i32, %arg2: memref<1x4x256xf32, #tpu.memory_space<vmem>>, %arg3: memref<1x4x1xf32, #tpu.memory_space<vmem>>, %arg4: memref<1x4x1xf32, #tpu.memory_space<vmem>>) attributes {dimension_semantics = [#tpu.dimension_semantics<parallel>, #tpu.dimension_semantics<arbitrary>], iteration_bounds = array<i64: 2, 1>, scalar_prefetch = 0 : i64, scratch_operands = 0 : i64, tpu.core_type = #tpu.core_type<tc>, window_params = [{transform_indices = @transform_0, window_bounds = array<i64: 1, 4, 256>}, {transform_indices = @transform_1, window_bounds = array<i64: 1, 4, 1>}, {transform_indices = @transform_2, window_bounds = array<i64: 1, 4, 1>}]} {
    %c0_i32 = arith.constant 0 : i32
    %0 = arith.cmpi eq, %arg1, %c0_i32 : i32
    %1 = arith.extui %0 : i1 to i32
    %c0_i32_0 = arith.constant 0 : i32
    %2 = arith.cmpi ne, %1, %c0_i32_0 : i32
    scf.if %2 {
      %cst_16 = arith.constant 0.000000e+00 : f32
      %22 = vector.broadcast %cst_16 : f32 to vector<1x4x1xf32>
      %c0_17 = arith.constant 0 : index
      %c0_18 = arith.constant 0 : index
      %c0_19 = arith.constant 0 : index
      %23 = vector.load %arg3[%c0_17, %c0_18, %c0_19] : memref<1x4x1xf32, #tpu.memory_space<vmem>>, vector<1x4x1xf32>
      tpu.vector_store %arg3[%c0_17, %c0_18, %c0_19], %22 {strides = array<i32>} : memref<1x4x1xf32, #tpu.memory_space<vmem>>, vector<1x4x1xf32>,
      %cst_20 = arith.constant 0.000000e+00 : f32
      %24 = vector.broadcast %cst_20 : f32 to vector<1x4x1xf32>
      %c0_21 = arith.constant 0 : index
      %c0_22 = arith.constant 0 : index
      %c0_23 = arith.constant 0 : index
      %25 = vector.load %arg4[%c0_21, %c0_22, %c0_23] : memref<1x4x1xf32, #tpu.memory_space<vmem>>, vector<1x4x1xf32>
      tpu.vector_store %arg4[%c0_21, %c0_22, %c0_23], %24 {strides = array<i32>} : memref<1x4x1xf32, #tpu.memory_space<vmem>>, vector<1x4x1xf32>,
    } else {
    }
    %c0 = arith.constant 0 : index
    %c0_1 = arith.constant 0 : index
    %c0_2 = arith.constant 0 : index
    %3 = vector.load %arg2[%c0, %c0_1, %c0_2] : memref<1x4x256xf32, #tpu.memory_space<vmem>>, vector<1x4x256xf32>
    %4 = vector.shape_cast %3 : vector<1x4x256xf32> to vector<4x256xf32>
    %c0_3 = arith.constant 0 : index
    %c0_4 = arith.constant 0 : index
    %c0_5 = arith.constant 0 : index
    %5 = vector.load %arg3[%c0_3, %c0_4, %c0_5] : memref<1x4x1xf32, #tpu.memory_space<vmem>>, vector<1x4x1xf32>
    %6 = vector.shape_cast %5 : vector<1x4x1xf32> to vector<4x1xf32>
    %cst = arith.constant dense<0.000000e+00> : vector<4xf32>
    %7 = vector.multi_reduction <add>, %4, %cst [1] : vector<4x256xf32> to vector<4xf32>
    %8 = vector.shape_cast %7 : vector<4xf32> to vector<4x1xf32>
    %9 = arith.addf %6, %8 : vector<4x1xf32>
    %c0_6 = arith.constant 0 : index
    %c0_7 = arith.constant 0 : index
    %c0_8 = arith.constant 0 : index
    %10 = vector.load %arg3[%c0_6, %c0_7, %c0_8] : memref<1x4x1xf32, #tpu.memory_space<vmem>>, vector<1x4x1xf32>
    %11 = vector.shape_cast %10 : vector<1x4x1xf32> to vector<4x1xf32>
    %12 = vector.shape_cast %9 : vector<4x1xf32> to vector<1x4x1xf32>
    tpu.vector_store %arg3[%c0_6, %c0_7, %c0_8], %12 {strides = array<i32>} : memref<1x4x1xf32, #tpu.memory_space<vmem>>, vector<1x4x1xf32>,
    %c0_9 = arith.constant 0 : index
    %c0_10 = arith.constant 0 : index
    %c0_11 = arith.constant 0 : index
    %13 = vector.load %arg4[%c0_9, %c0_10, %c0_11] : memref<1x4x1xf32, #tpu.memory_space<vmem>>, vector<1x4x1xf32>
    %14 = vector.shape_cast %13 : vector<1x4x1xf32> to vector<4x1xf32>
    %15 = arith.mulf %4, %4 : vector<4x256xf32>
    %cst_12 = arith.constant dense<0.000000e+00> : vector<4xf32>
    %16 = vector.multi_reduction <add>, %15, %cst_12 [1] : vector<4x256xf32> to vector<4xf32>
    %17 = vector.shape_cast %16 : vector<4xf32> to vector<4x1xf32>
    %18 = arith.addf %14, %17 : vector<4x1xf32>
    %c0_13 = arith.constant 0 : index
    %c0_14 = arith.constant 0 : index
    %c0_15 = arith.constant 0 : index
    %19 = vector.load %arg4[%c0_13, %c0_14, %c0_15] : memref<1x4x1xf32, #tpu.memory_space<vmem>>, vector<1x4x1xf32>
    %20 = vector.shape_cast %19 : vector<1x4x1xf32> to vector<4x1xf32>
    %21 = vector.shape_cast %18 : vector<4x1xf32> to vector<1x4x1xf32>
    tpu.vector_store %arg4[%c0_13, %c0_14, %c0_15], %21 {strides = array<i32>} : memref<1x4x1xf32, #tpu.memory_space<vmem>>, vector<1x4x1xf32>,
    return
  }
  func.func @transform_0(%arg0: i32, %arg1: i32) -> (i32, i32, i32) {
    %c0_i32 = arith.constant 0 : i32
    %c0_i32_0 = arith.constant 0 : i32
    return %arg0, %c0_i32, %arg1 : i32, i32, i32
  }
  func.func @transform_1(%arg0: i32, %arg1: i32) -> (i32, i32, i32) {
    %c0_i32 = arith.constant 0 : i32
    %c0_i32_0 = arith.constant 0 : i32
    %c0_i32_1 = arith.constant 0 : i32
    return %arg0, %c0_i32, %c0_i32_0 : i32, i32, i32
  }
  func.func @transform_2(%arg0: i32, %arg1: i32) -> (i32, i32, i32) {
    %c0_i32 = arith.constant 0 : i32
    %c0_i32_0 = arith.constant 0 : i32
    %c0_i32_1 = arith.constant 0 : i32
    return %arg0, %c0_i32, %c0_i32_0 : i32, i32, i32
  }
}

module attributes {stable_mosaic.version = 11 : i64} {
  func.func @_normalize_kernel(%arg0: i32, %arg1: i32, %arg2: memref<1x4x256xf32, #tpu.memory_space<vmem>>, %arg3: memref<4x1xf32, #tpu.memory_space<vmem>>, %arg4: memref<4x1xf32, #tpu.memory_space<vmem>>, %arg5: memref<1x4x256xf32, #tpu.memory_space<vmem>>) attributes {dimension_semantics = [#tpu.dimension_semantics<parallel>, #tpu.dimension_semantics<parallel>], iteration_bounds = array<i64: 2, 1>, scalar_prefetch = 0 : i64, scratch_operands = 0 : i64, tpu.core_type = #tpu.core_type<tc>, window_params = [{transform_indices = @transform_0, window_bounds = array<i64: 1, 4, 256>}, {pipeline_mode = #tpu.pipeline_mode<synchronous>, transform_indices = @transform_1, window_bounds = array<i64: 4, 1>}, {pipeline_mode = #tpu.pipeline_mode<synchronous>, transform_indices = @transform_2, window_bounds = array<i64: 4, 1>}, {transform_indices = @transform_3, window_bounds = array<i64: 1, 4, 256>}]} {
    %c0 = arith.constant 0 : index
    %c0_0 = arith.constant 0 : index
    %c0_1 = arith.constant 0 : index
    %0 = vector.load %arg2[%c0, %c0_0, %c0_1] : memref<1x4x256xf32, #tpu.memory_space<vmem>>, vector<1x4x256xf32>
    %1 = vector.shape_cast %0 : vector<1x4x256xf32> to vector<4x256xf32>
    %c0_2 = arith.constant 0 : index
    %c0_3 = arith.constant 0 : index
    %2 = vector.load %arg3[%c0_2, %c0_3] : memref<4x1xf32, #tpu.memory_space<vmem>>, vector<4x1xf32>
    %3 = vector.broadcast %2 : vector<4x1xf32> to vector<4x256xf32>
    %4 = arith.mulf %1, %3 : vector<4x256xf32>
    %c0_4 = arith.constant 0 : index
    %c0_5 = arith.constant 0 : index
    %5 = vector.load %arg4[%c0_4, %c0_5] : memref<4x1xf32, #tpu.memory_space<vmem>>, vector<4x1xf32>
    %6 = vector.broadcast %5 : vector<4x1xf32> to vector<4x256xf32>
    %7 = arith.addf %4, %6 : vector<4x256xf32>
    %c0_6 = arith.constant 0 : index
    %c0_7 = arith.constant 0 : index
    %c0_8 = arith.constant 0 : index
    %8 = vector.load %arg5[%c0_6, %c0_7, %c0_8] : memref<1x4x256xf32, #tpu.memory_space<vmem>>, vector<1x4x256xf32>
    %9 = vector.shape_cast %8 : vector<1x4x256xf32> to vector<4x256xf32>
    %10 = vector.shape_cast %7 : vector<4x256xf32> to vector<1x4x256xf32>
    tpu.vector_store %arg5[%c0_6, %c0_7, %c0_8], %10 {strides = array<i32>} : memref<1x4x256xf32, #tpu.memory_space<vmem>>, vector<1x4x256xf32>,
    return
  }
  func.func @transform_0(%arg0: i32, %arg1: i32) -> (i32, i32, i32) {
    %c0_i32 = arith.constant 0 : i32
    %c0_i32_0 = arith.constant 0 : i32
    return %arg0, %c0_i32, %arg1 : i32, i32, i32
  }
  func.func @transform_1(%arg0: i32, %arg1: i32) -> (i32, i32) {
    %c0_i32 = arith.constant 0 : i32
    %c0_i32_0 = arith.constant 0 : i32
    %c0_i32_1 = arith.constant 0 : i32
    return %c0_i32, %c0_i32_0 : i32, i32
  }
  func.func @transform_2(%arg0: i32, %arg1: i32) -> (i32, i32) {
    %c0_i32 = arith.constant 0 : i32
    %c0_i32_0 = arith.constant 0 : i32
    %c0_i32_1 = arith.constant 0 : i32
    return %c0_i32, %c0_i32_0 : i32, i32
  }
  func.func @transform_3(%arg0: i32, %arg1: i32) -> (i32, i32, i32) {
    %c0_i32 = arith.constant 0 : i32
    %c0_i32_0 = arith.constant 0 : i32
    return %arg0, %c0_i32, %arg1 : i32, i32, i32
  }
}

</mosaic_0001>

<llo_original>
// kernel: fixed_reduction_forward.3
$region0: #{fixed_reduction_forward.3}
  #allocation0 [shape = 'u32[]', space=smem, size = 0x4, offset = 0x4, fixed_abs, tag = 'smem constant byte address 0x4 - core index']
  #allocation1 [shape = 'u32[72,128]{1,0:T(1,128)}', space=vmem, size = 0x9000, scoped, tag = 'internal scratch']
  %s0 = inlined_call_operand.vmem [shape: f32[2,4,256], index: 0, kind: input, shape index: {}]
  %s1 = inlined_call_operand.vmem [shape: f32[4,1], index: 1, kind: input, shape index: {}]
  %s2 = inlined_call_operand.vmem [shape: f32[4,1], index: 2, kind: input, shape index: {}]
  %s3 = inlined_call_operand.vmem [shape: f32[2,4,256], index: 3, kind: output, shape index: {}]
  %s4 = sld [smem:[#allocation0]]
  $region45: #{fixed_reduction_forward.3} parent=0
    _
  %s6 = ssub.s32 1, %s4
  %s7 = scalar_select 0, %s6, %s4
  loop: start=0, step=1, limit=4
  $region2: #{fixed_reduction_forward.3} parent=0 // loop_pre_header
    _
  $region3: #{fixed_reduction_forward.3} parent=0 // loop_header
    %s9 = sphi 0, %s13
    %p10 = scmp.ge.s32.totalorder %s9, 4
    %s16 = sphi 0, %s28
    %s17 = sphi 0, %s24
    %s18 = sphi 0, %s16
    %s19 = sphi 0, %s17
    %s20 = sphi 0, %s18
    %s21 = sphi 0, %s19
    %s33 = sphi 0, %s35
    %s36 = sphi 0, %s33
    %s37 = sphi 0, %s36
    %s53 = sphi 0, %s37
    %s57 = sphi 0, %s57
    %s59 = sphi 0, %s57
    %s60 = sphi 0, %s59
    %s74 = sphi 0, %s60
    %s78 = sphi 0, %s78
    %s80 = sphi 0, %s78
    %s81 = sphi 0, %s80
    %s95 = sphi 0, %s81
    %s103 = sphi 0, %s105
    %s106 = sphi 0, %s103
    %s107 = sphi 0, %s106
    %s123 = sphi 0, %s107
  $region4: #{fixed_reduction_forward.3} parent=0 // loop_header_branch
    %12 = sbr.rel (%p10) target = $region8
  $region5: #{fixed_reduction_forward.3} parent=0 // loop_body
    %s14 = ssub.s32 %s9, 1
    %s15 = ssub.s32 %s9, 2
    %s22 = sadd.s32 1, %s17
    %p23 = scmp.ge.s32.totalorder %s22, 1
    %s24 = scalar_select %p23, 0, %s22
    %s25 = sadd.s32 1, %s16
    %s26 = scalar_select %p23, %s25, %s16
    %p27 = scmp.ge.s32.totalorder %s26, 2
    %s28 = scalar_select %p27, 0, %s26
    %s29 = ssub.s32 %s16, %s28
    %s30 = ssub.s32 %s17, %s24
    %s31 = sor.u32 %s29, %s30
    %p32 = scmp.eq.s32.totalorder %s31, 0
    %s34 = sadd.s32 %s33, 1
    %s35 = scalar_select %p32, %s33, %s34
    %p38 = pneg %p32
    %p39 = scmp.eq.s32.totalorder %s9, 1
    %p40 = por %p38, %p39
    %p41 = scmp.ne.s32.totalorder %s33, %s36
    %p42 = scmp.eq.s32.totalorder %s9, 0
    %p43 = por %p41, %p42
    %p44 = scmp.ne.s32.totalorder %s33, %s36
    %p45 = scmp.eq.s32.totalorder %s14, 1
    %p46 = por %p44, %p45
    %p47 = scmp.ne.s32.totalorder %s36, %s37
    %p48 = scmp.eq.s32.totalorder %s14, 0
    %p49 = por %p47, %p48
    %p50 = scmp.ne.s32.totalorder %s36, %s37
    %p51 = scmp.eq.s32.totalorder %s15, 1
    %p52 = por %p50, %p51
    %p54 = scmp.ne.s32.totalorder %s37, %s53
    %p55 = scmp.eq.s32.totalorder %s15, 0
    %p56 = por %p54, %p55
    %s58 = sadd.s32 %s57, 1
    %p61 = scmp.eq.s32.totalorder %s9, 1
    %p62 = scmp.ne.s32.totalorder %s57, %s59
    %p63 = scmp.eq.s32.totalorder %s9, 0
    %p64 = por %p62, %p63
    %p65 = scmp.ne.s32.totalorder %s57, %s59
    %p66 = scmp.eq.s32.totalorder %s14, 1
    %p67 = por %p65, %p66
    %p68 = scmp.ne.s32.totalorder %s59, %s60
    %p69 = scmp.eq.s32.totalorder %s14, 0
    %p70 = por %p68, %p69
    %p71 = scmp.ne.s32.totalorder %s59, %s60
    %p72 = scmp.eq.s32.totalorder %s15, 1
    %p73 = por %p71, %p72
    %p75 = scmp.ne.s32.totalorder %s60, %s74
    %p76 = scmp.eq.s32.totalorder %s15, 0
    %p77 = por %p75, %p76
    %s79 = sadd.s32 %s78, 1
    %p82 = scmp.eq.s32.totalorder %s9, 1
    %p83 = scmp.ne.s32.totalorder %s78, %s80
    %p84 = scmp.eq.s32.totalorder %s9, 0
    %p85 = por %p83, %p84
    %p86 = scmp.ne.s32.totalorder %s78, %s80
    %p87 = scmp.eq.s32.totalorder %s14, 1
    %p88 = por %p86, %p87
    %p89 = scmp.ne.s32.totalorder %s80, %s81
    %p90 = scmp.eq.s32.totalorder %s14, 0
    %p91 = por %p89, %p90
    %p92 = scmp.ne.s32.totalorder %s80, %s81
    %p93 = scmp.eq.s32.totalorder %s15, 1
    %p94 = por %p92, %p93
    %p96 = scmp.ne.s32.totalorder %s81, %s95
    %p97 = scmp.eq.s32.totalorder %s15, 0
    %p98 = por %p96, %p97
    %s99 = ssub.s32 %s16, %s28
    %s100 = ssub.s32 %s17, %s24
    %s101 = sor.u32 %s99, %s100
    %p102 = scmp.eq.s32.totalorder %s101, 0
    %s104 = sadd.s32 %s103, 1
    %s105 = scalar_select %p102, %s103, %s104
    %p108 = pneg %p102
    %p109 = scmp.eq.s32.totalorder %s9, 1
    %p110 = por %p108, %p109
    %p111 = scmp.ne.s32.totalorder %s103, %s106
    %p112 = scmp.eq.s32.totalorder %s9, 0
    %p113 = por %p111, %p112
    %p114 = scmp.ne.s32.totalorder %s103, %s106
    %p115 = scmp.eq.s32.totalorder %s14, 1
    %p116 = por %p114, %p115
    %p117 = scmp.ne.s32.totalorder %s106, %s107
    %p118 = scmp.eq.s32.totalorder %s14, 0
    %p119 = por %p117, %p118
    %p120 = scmp.ne.s32.totalorder %s106, %s107
    %p121 = scmp.eq.s32.totalorder %s15, 1
    %p122 = por %p120, %p121
    %p124 = scmp.ne.s32.totalorder %s107, %s123
    %p125 = scmp.eq.s32.totalorder %s15, 0
    %p126 = por %p124, %p125
    %p127 = scmp.le.s32.totalorder 1, %s9
    %p128 = scmp.lt.s32.totalorder %s9, 3
    %p129 = pnand %p127, %p128
    %p130 = pneg %p129
    // Predicated region
    $region9: #{fixed_reduction_forward.3} parent=5 // pred_check
      _
    $region10: #{fixed_reduction_forward.3} parent=5 // pred_check_branch
      %132 = sbr.rel (%p129) target = $region12
    $region11: #{fixed_reduction_forward.3} parent=5 // pred_region
      %s133 = ssub.s32 %s9, 1
      // Predicated region
      $region13: #{fixed_reduction_forward.3} parent=11 // pred_check
        %p134 = pneg %p70
      $region14: #{fixed_reduction_forward.3} parent=11 // pred_check_branch
        %136 = sbr.rel (%p134) target = $region16
      $region15: #{fixed_reduction_forward.3} parent=11 // pred_region
        _
      $region16: #{fixed_reduction_forward.3} parent=11 // pred_fallthru
        _
      // Predicated region
      $region17: #{fixed_reduction_forward.3} parent=11 // pred_check
        %p137 = pneg %p91
      $region18: #{fixed_reduction_forward.3} parent=11 // pred_check_branch
        %139 = sbr.rel (%p137) target = $region20
      $region19: #{fixed_reduction_forward.3} parent=11 // pred_region
        _
      $region20: #{fixed_reduction_forward.3} parent=11 // pred_fallthru
        _
    $region12: #{fixed_reduction_forward.3} parent=5 // pred_fallthru
      _
    %p140 = scmp.lt.s32.totalorder %s9, 2
    // Predicated region
    $region21: #{fixed_reduction_forward.3} parent=5 // pred_check
      %p141 = pneg %p140
    $region22: #{fixed_reduction_forward.3} parent=5 // pred_check_branch
      %143 = sbr.rel (%p141) target = $region24
    $region23: #{fixed_reduction_forward.3} parent=5 // pred_region
      // Predicated region
      $region25: #{fixed_reduction_forward.3} parent=23 // pred_check
        %p144 = pneg %p43
      $region26: #{fixed_reduction_forward.3} parent=23 // pred_check_branch
        %146 = sbr.rel (%p144) target = $region28
      $region27: #{fixed_reduction_forward.3} parent=23 // pred_region
        %s147 = smul.u32 2, %s17
        %p148 = scmp.lt.s32.totalorder %s16, 1
        %s149 = scalar_select %p148, %s16, 1
        %p150 = scmp.lt.s32.totalorder %s147, 1
        %s151 = scalar_select %p150, %s147, 1
        %s152 = smul.addr %s149, 2
        %s153 = sadd.s32 %s151, %s152
        %s154 = smul.addr %s153, 4
        %s155 = scalar_lea.vmem %s0, %s154
        %s156 = smul.u32 2, %s17
      $region28: #{fixed_reduction_forward.3} parent=23 // pred_fallthru
        _
    $region24: #{fixed_reduction_forward.3} parent=5 // pred_fallthru
      _
    %p157 = scmp.le.s32.totalorder 1, %s9
    %p158 = scmp.lt.s32.totalorder %s9, 3
    %p159 = pnand %p157, %p158
    %p160 = pneg %p159
    // Predicated region
    $region29: #{fixed_reduction_forward.3} parent=5 // pred_check
      _
    $region30: #{fixed_reduction_forward.3} parent=5 // pred_check_branch
      %162 = sbr.rel (%p159) target = $region32
    $region31: #{fixed_reduction_forward.3} parent=5 // pred_region
      %s163 = ssub.s32 %s9, 1
      %s164 = smul.u32 2, %s19
      %p165 = scmp.lt.s32.totalorder %s18, 1
      %s166 = scalar_select %p165, %s18, 1
      %p167 = scmp.lt.s32.totalorder %s164, 1
      %s168 = scalar_select %p167, %s164, 1
      %s169 = smul.addr %s166, 2
      %s170 = sadd.s32 %s168, %s169
      %s171 = smul.addr %s170, 4
      %s172 = scalar_lea.vmem %s0, %s171
      %p173 = pneg %p49
      %p174 = pneg %p46
      %p175 = pneg %p70
      %p176 = pneg %p67
      %p177 = pneg %p91
      %p178 = pneg %p88
      %p179 = pneg %p119
      %p180 = pneg %p116
      %s181 = smul.u32 2, %s19
      %p182 = scmp.lt.s32.totalorder %s18, 1
      %s183 = scalar_select %p182, %s18, 1
      %p184 = scmp.lt.s32.totalorder %s181, 1
      %s185 = scalar_select %p184, %s181, 1
      %s186 = smul.addr %s183, 2
      %s187 = sadd.s32 %s185, %s186
      %s188 = smul.addr %s187, 4
      %s189 = scalar_lea.vmem %s3, %s188
      %s190 = smul.u32 2, %s19
      %p191 = scmp.lt.s32.totalorder %s18, 1
      %s192 = scalar_select %p191, %s18, 1
      %p193 = scmp.lt.s32.totalorder %s190, 1
      %s194 = scalar_select %p193, %s190, 1
      %s195 = smul.addr %s192, 2
      %s196 = sadd.s32 %s194, %s195
      %s197 = smul.addr %s196, 4
      %s198 = scalar_lea.vmem %s0, %s197
      %s199 = smul.u32 2, %s19
      %s200 = smul.u32 2, %s19
      %p201 = scmp.lt.s32.totalorder %s18, 1
      %s202 = scalar_select %p201, %s18, 1
      %p203 = scmp.lt.s32.totalorder %s200, 1
      %s204 = scalar_select %p203, %s200, 1
      %s205 = smul.addr %s202, 2
      %s206 = sadd.s32 %s204, %s205
      %s207 = smul.addr %s206, 4
      %s208 = scalar_lea.vmem %s3, %s207
      %s209 = smul.u32 2, %s19
      %v210 = vld [vmem:[%s198] sm:$0xff]
      %v211 = vld [vmem:[%s1] sm:$0xf]
      %213 = vset.pattern.permute.xlu0 0
      %214 = vperm.xlu0 %213, %v211
      %v215 = vpop.permute.xlu0 %214
      %v217 = vunpack.c.l.s4 839922192
      %v218 = vunpack.c.0.s8 %v217
      %v219 = vperm.slane %v215, %v218
      %v221 = vmul.f32 %v210, %v219
      %v222 = vld [vmem:[%s2] sm:$0xf]
      %224 = vset.pattern.permute.xlu0 0
      %225 = vperm.xlu0 %224, %v222
      %v226 = vpop.permute.xlu0 %225
      %v228 = vunpack.c.l.s4 839922192
      %v229 = vunpack.c.0.s8 %v228
      %v230 = vperm.slane %v226, %v229
      %v232 = vadd.f32 %v221, %v230
      %233 = vst [vmem:[%s208] sm:$0xff] %v232
      %s234 = smul.u32 2, %s19
      %p235 = scmp.lt.s32.totalorder %s18, 1
      %s236 = scalar_select %p235, %s18, 1
      %p237 = scmp.lt.s32.totalorder %s234, 1
      %s238 = scalar_select %p237, %s234, 1
      %s239 = smul.addr %s236, 2
      %s240 = sadd.s32 %s238, %s239
      %s241 = smul.addr %s240, 4
      %s242 = scalar_lea.vmem %s3, %s241
      // Predicated region
      $region33: #{fixed_reduction_forward.3} parent=31 // pred_check
        %p243 = pneg %p116
      $region34: #{fixed_reduction_forward.3} parent=31 // pred_check_branch
        %245 = sbr.rel (%p243) target = $region36
      $region35: #{fixed_reduction_forward.3} parent=31 // pred_region
        %s246 = smul.u32 2, %s19
      $region36: #{fixed_reduction_forward.3} parent=31 // pred_fallthru
        _
    $region32: #{fixed_reduction_forward.3} parent=5 // pred_fallthru
      _
    %p247 = scmp.le.s32.totalorder 2, %s9
    // Predicated region
    $region37: #{fixed_reduction_forward.3} parent=5 // pred_check
      %p248 = pneg %p247
    $region38: #{fixed_reduction_forward.3} parent=5 // pred_check_branch
      %250 = sbr.rel (%p248) target = $region40
    $region39: #{fixed_reduction_forward.3} parent=5 // pred_region
      %s251 = ssub.s32 %s9, 2
      // Predicated region
      $region41: #{fixed_reduction_forward.3} parent=39 // pred_check
        %p252 = pneg %p122
      $region42: #{fixed_reduction_forward.3} parent=39 // pred_check_branch
        %254 = sbr.rel (%p252) target = $region44
      $region43: #{fixed_reduction_forward.3} parent=39 // pred_region
        %s255 = smul.u32 2, %s21
        %p256 = scmp.lt.s32.totalorder %s20, 1
        %s257 = scalar_select %p256, %s20, 1
        %p258 = scmp.lt.s32.totalorder %s255, 1
        %s259 = scalar_select %p258, %s255, 1
        %s260 = smul.addr %s257, 2
        %s261 = sadd.s32 %s259, %s260
        %s262 = smul.addr %s261, 4
        %s263 = scalar_lea.vmem %s3, %s262
      $region44: #{fixed_reduction_forward.3} parent=39 // pred_fallthru
        _
    $region40: #{fixed_reduction_forward.3} parent=5 // pred_fallthru
      _
  $region6: #{fixed_reduction_forward.3} parent=0 // loop_footer
    %s13 = sadd.s32 1, %s9
  $region7: #{fixed_reduction_forward.3} parent=0 // loop_footer_branch
    %8 = sbr.rel target = $region3
  $region8: #{fixed_reduction_forward.3} parent=0 // loop_exit
    _

// kernel: fixed_reduction_forward.2
$region0: #{fixed_reduction_forward.2}
  #allocation0 [shape = 'u32[]', space=smem, size = 0x4, offset = 0x4, fixed_abs, tag = 'smem constant byte address 0x4 - core index']
  #allocation1 [shape = 'u32[72,128]{1,0:T(1,128)}', space=vmem, size = 0x9000, scoped, tag = 'internal scratch']
  %s0 = inlined_call_operand.vmem [shape: f32[2,4,256], index: 0, kind: input, shape index: {}]
  %s1 = inlined_call_operand.vmem [shape: f32[2,4,1], index: 1, kind: output, shape index: {0}]
  %s2 = inlined_call_operand.vmem [shape: f32[2,4,1], index: 2, kind: output, shape index: {1}]
  %3 = xla_tuple %s1, %s2
  %s4 = sld [smem:[#allocation0]]
  $region49: #{fixed_reduction_forward.2} parent=0
    _
  %s6 = ssub.s32 1, %s4
  %s7 = scalar_select 0, %s6, %s4
  loop: start=0, step=1, limit=4
  $region2: #{fixed_reduction_forward.2} parent=0 // loop_pre_header
    _
  $region3: #{fixed_reduction_forward.2} parent=0 // loop_header
    %s9 = sphi 0, %s13
    %p10 = scmp.ge.s32.totalorder %s9, 4
    %s16 = sphi 0, %s28
    %s17 = sphi 0, %s24
    %s18 = sphi 0, %s16
    %s19 = sphi 0, %s17
    %s20 = sphi 0, %s18
    %s21 = sphi 0, %s19
    %s33 = sphi 0, %s35
    %s36 = sphi 0, %s33
    %s37 = sphi 0, %s36
    %s53 = sphi 0, %s37
    %s59 = sphi 0, %s61
    %s62 = sphi 0, %s59
    %s63 = sphi 0, %s62
    %s79 = sphi 0, %s63
    %s85 = sphi 0, %s87
    %s88 = sphi 0, %s85
    %s89 = sphi 0, %s88
    %s105 = sphi 0, %s89
  $region4: #{fixed_reduction_forward.2} parent=0 // loop_header_branch
    %12 = sbr.rel (%p10) target = $region8
  $region5: #{fixed_reduction_forward.2} parent=0 // loop_body
    %s14 = ssub.s32 %s9, 1
    %s15 = ssub.s32 %s9, 2
    %s22 = sadd.s32 1, %s17
    %p23 = scmp.ge.s32.totalorder %s22, 1
    %s24 = scalar_select %p23, 0, %s22
    %s25 = sadd.s32 1, %s16
    %s26 = scalar_select %p23, %s25, %s16
    %p27 = scmp.ge.s32.totalorder %s26, 2
    %s28 = scalar_select %p27, 0, %s26
    %s29 = ssub.s32 %s16, %s28
    %s30 = ssub.s32 %s17, %s24
    %s31 = sor.u32 %s29, %s30
    %p32 = scmp.eq.s32.totalorder %s31, 0
    %s34 = sadd.s32 %s33, 1
    %s35 = scalar_select %p32, %s33, %s34
    %p38 = pneg %p32
    %p39 = scmp.eq.s32.totalorder %s9, 1
    %p40 = por %p38, %p39
    %p41 = scmp.ne.s32.totalorder %s33, %s36
    %p42 = scmp.eq.s32.totalorder %s9, 0
    %p43 = por %p41, %p42
    %p44 = scmp.ne.s32.totalorder %s33, %s36
    %p45 = scmp.eq.s32.totalorder %s14, 1
    %p46 = por %p44, %p45
    %p47 = scmp.ne.s32.totalorder %s36, %s37
    %p48 = scmp.eq.s32.totalorder %s14, 0
    %p49 = por %p47, %p48
    %p50 = scmp.ne.s32.totalorder %s36, %s37
    %p51 = scmp.eq.s32.totalorder %s15, 1
    %p52 = por %p50, %p51
    %p54 = scmp.ne.s32.totalorder %s37, %s53
    %p55 = scmp.eq.s32.totalorder %s15, 0
    %p56 = por %p54, %p55
    %s57 = ssub.s32 %s16, %s28
    %p58 = scmp.eq.s32.totalorder %s57, 0
    %s60 = sadd.s32 %s59, 1
    %s61 = scalar_select %p58, %s59, %s60
    %p64 = pneg %p58
    %p65 = scmp.eq.s32.totalorder %s9, 1
    %p66 = por %p64, %p65
    %p67 = scmp.ne.s32.totalorder %s59, %s62
    %p68 = scmp.eq.s32.totalorder %s9, 0
    %p69 = por %p67, %p68
    %p70 = scmp.ne.s32.totalorder %s59, %s62
    %p71 = scmp.eq.s32.totalorder %s14, 1
    %p72 = por %p70, %p71
    %p73 = scmp.ne.s32.totalorder %s62, %s63
    %p74 = scmp.eq.s32.totalorder %s14, 0
    %p75 = por %p73, %p74
    %p76 = scmp.ne.s32.totalorder %s62, %s63
    %p77 = scmp.eq.s32.totalorder %s15, 1
    %p78 = por %p76, %p77
    %p80 = scmp.ne.s32.totalorder %s63, %s79
    %p81 = scmp.eq.s32.totalorder %s15, 0
    %p82 = por %p80, %p81
    %s83 = ssub.s32 %s16, %s28
    %p84 = scmp.eq.s32.totalorder %s83, 0
    %s86 = sadd.s32 %s85, 1
    %s87 = scalar_select %p84, %s85, %s86
    %p90 = pneg %p84
    %p91 = scmp.eq.s32.totalorder %s9, 1
    %p92 = por %p90, %p91
    %p93 = scmp.ne.s32.totalorder %s85, %s88
    %p94 = scmp.eq.s32.totalorder %s9, 0
    %p95 = por %p93, %p94
    %p96 = scmp.ne.s32.totalorder %s85, %s88
    %p97 = scmp.eq.s32.totalorder %s14, 1
    %p98 = por %p96, %p97
    %p99 = scmp.ne.s32.totalorder %s88, %s89
    %p100 = scmp.eq.s32.totalorder %s14, 0
    %p101 = por %p99, %p100
    %p102 = scmp.ne.s32.totalorder %s88, %s89
    %p103 = scmp.eq.s32.totalorder %s15, 1
    %p104 = por %p102, %p103
    %p106 = scmp.ne.s32.totalorder %s89, %s105
    %p107 = scmp.eq.s32.totalorder %s15, 0
    %p108 = por %p106, %p107
    %p109 = scmp.le.s32.totalorder 1, %s9
    %p110 = scmp.lt.s32.totalorder %s9, 3
    %p111 = pnand %p109, %p110
    %p112 = pneg %p111
    // Predicated region
    $region9: #{fixed_reduction_forward.2} parent=5 // pred_check
      _
    $region10: #{fixed_reduction_forward.2} parent=5 // pred_check_branch
      %114 = sbr.rel (%p111) target = $region12
    $region11: #{fixed_reduction_forward.2} parent=5 // pred_region
      %s115 = ssub.s32 %s9, 1
    $region12: #{fixed_reduction_forward.2} parent=5 // pred_fallthru
      _
    %p116 = scmp.lt.s32.totalorder %s9, 2
    // Predicated region
    $region13: #{fixed_reduction_forward.2} parent=5 // pred_check
      %p117 = pneg %p116
    $region14: #{fixed_reduction_forward.2} parent=5 // pred_check_branch
      %119 = sbr.rel (%p117) target = $region16
    $region15: #{fixed_reduction_forward.2} parent=5 // pred_region
      // Predicated region
      $region17: #{fixed_reduction_forward.2} parent=15 // pred_check
        %p120 = pneg %p43
      $region18: #{fixed_reduction_forward.2} parent=15 // pred_check_branch
        %122 = sbr.rel (%p120) target = $region20
      $region19: #{fixed_reduction_forward.2} parent=15 // pred_region
        %s123 = smul.u32 2, %s17
        %p124 = scmp.lt.s32.totalorder %s16, 1
        %s125 = scalar_select %p124, %s16, 1
        %p126 = scmp.lt.s32.totalorder %s123, 1
        %s127 = scalar_select %p126, %s123, 1
        %s128 = smul.addr %s125, 2
        %s129 = sadd.s32 %s127, %s128
        %s130 = smul.addr %s129, 4
        %s131 = scalar_lea.vmem %s0, %s130
        %s132 = smul.u32 2, %s17
      $region20: #{fixed_reduction_forward.2} parent=15 // pred_fallthru
        _
    $region16: #{fixed_reduction_forward.2} parent=5 // pred_fallthru
      _
    %p133 = scmp.le.s32.totalorder 1, %s9
    %p134 = scmp.lt.s32.totalorder %s9, 3
    %p135 = pnand %p133, %p134
    %p136 = pneg %p135
    // Predicated region
    $region21: #{fixed_reduction_forward.2} parent=5 // pred_check
      _
    $region22: #{fixed_reduction_forward.2} parent=5 // pred_check_branch
      %138 = sbr.rel (%p135) target = $region24
    $region23: #{fixed_reduction_forward.2} parent=5 // pred_region
      %s139 = ssub.s32 %s9, 1
      %s140 = smul.u32 2, %s19
      %p141 = scmp.lt.s32.totalorder %s18, 1
      %s142 = scalar_select %p141, %s18, 1
      %p143 = scmp.lt.s32.totalorder %s140, 1
      %s144 = scalar_select %p143, %s140, 1
      %s145 = smul.addr %s142, 2
      %s146 = sadd.s32 %s144, %s145
      %s147 = smul.addr %s146, 4
      %s148 = scalar_lea.vmem %s0, %s147
      %p149 = pneg %p49
      %p150 = pneg %p46
      %p151 = pneg %p75
      %p152 = pneg %p72
      %p153 = scmp.lt.s32.totalorder %s18, 1
      %s154 = scalar_select %p153, %s18, 1
      %s155 = smul.addr %s154, 4
      %s156 = scalar_lea.vmem %s1, %s155
      %p157 = pneg %p101
      %p158 = pneg %p98
      %p159 = scmp.lt.s32.totalorder %s18, 1
      %s160 = scalar_select %p159, %s18, 1
      %s161 = smul.addr %s160, 4
      %s162 = scalar_lea.vmem %s2, %s161
      %s163 = smul.u32 2, %s19
      %p164 = scmp.lt.s32.totalorder %s18, 1
      %s165 = scalar_select %p164, %s18, 1
      %p166 = scmp.lt.s32.totalorder %s163, 1
      %s167 = scalar_select %p166, %s163, 1
      %s168 = smul.addr %s165, 2
      %s169 = sadd.s32 %s167, %s168
      %s170 = smul.addr %s169, 4
      %s171 = scalar_lea.vmem %s0, %s170
      %s172 = smul.u32 2, %s19
      %p173 = scmp.lt.s32.totalorder %s18, 1
      %s174 = scalar_select %p173, %s18, 1
      %s175 = smul.addr %s174, 4
      %s176 = scalar_lea.vmem %s1, %s175
      %p177 = scmp.lt.s32.totalorder %s18, 1
      %s178 = scalar_select %p177, %s18, 1
      %s179 = smul.addr %s178, 4
      %s180 = scalar_lea.vmem %s2, %s179
      %p181 = scmp.eq.s32.totalorder %s19, 0
      // Predicated region
      $region25: #{fixed_reduction_forward.2} parent=23 // pred_check
        %p182 = pneg %p181
      $region26: #{fixed_reduction_forward.2} parent=23 // pred_check_branch
        %184 = sbr.rel (%p182) target = $region28
      $region27: #{fixed_reduction_forward.2} parent=23 // pred_region
        %vm185 = vcmask 3072
        %186 = vst.msk [vmem:[%s176] sm:$0xf] %vm185, 0.0
        %187 = vst.msk [vmem:[%s180] sm:$0xf] %vm185, 0.0
      $region28: #{fixed_reduction_forward.2} parent=23 // pred_fallthru
        _
      %v188 = vld [vmem:[%s171] sm:$0xff]
      %v189 = vld [vmem:[%s176] sm:$0xf]
      %191 = vst [vmem:[#allocation1] ss:$2 sm:$0xff] %v188
      %v192 = vld.sshfl [vmem:[#allocation1] sm:$0xff pattern:$0x75316420]
      %v193 = vld.sshfl [vmem:[#allocation1 + $0x8] sm:$0xff pattern:$0x75316420]
      %vm196 = vcmask 1043456
      %v197 = vsel %vm196, %v192, 0.0
      %v198 = vsel %vm196, %v193, 0.0
      %v199 = vadd.f32 %v197, %v198
      %200 = vadd.xlane.f32.xlu0 %v199
      %v201 = vpop.xlane.xlu0 %200
      %v202 = vadd.f32 %v189, %v201
      %vm203 = vcmask 3072
      %204 = vst.msk [vmem:[%s176] sm:$0xf] %vm203, %v202
      %v205 = vld [vmem:[%s180] sm:$0xf]
      %v206 = vmul.f32 %v188, %v188
      %208 = vst [vmem:[#allocation1] ss:$2 sm:$0xff] %v206
      %v209 = vld.sshfl [vmem:[#allocation1] sm:$0xff pattern:$0x75316420]
      %v210 = vld.sshfl [vmem:[#allocation1 + $0x8] sm:$0xff pattern:$0x75316420]
      %v213 = vsel %vm196, %v209, 0.0
      %v214 = vsel %vm196, %v210, 0.0
      %v215 = vadd.f32 %v213, %v214
      %216 = vadd.xlane.f32.xlu0 %v215
      %v217 = vpop.xlane.xlu0 %216
      %v218 = vadd.f32 %v205, %v217
      %219 = vst.msk [vmem:[%s180] sm:$0xf] %vm203, %v218
      %p220 = scmp.lt.s32.totalorder %s18, 1
      %s221 = scalar_select %p220, %s18, 1
      %s222 = smul.addr %s221, 4
      %s223 = scalar_lea.vmem %s1, %s222
      %p224 = scmp.lt.s32.totalorder %s18, 1
      %s225 = scalar_select %p224, %s18, 1
      %s226 = smul.addr %s225, 4
      %s227 = scalar_lea.vmem %s2, %s226
      // Predicated region
      $region29: #{fixed_reduction_forward.2} parent=23 // pred_check
        %p228 = pneg %p72
      $region30: #{fixed_reduction_forward.2} parent=23 // pred_check_branch
        %230 = sbr.rel (%p228) target = $region32
      $region31: #{fixed_reduction_forward.2} parent=23 // pred_region
        _
      $region32: #{fixed_reduction_forward.2} parent=23 // pred_fallthru
        _
      // Predicated region
      $region33: #{fixed_reduction_forward.2} parent=23 // pred_check
        %p231 = pneg %p98
      $region34: #{fixed_reduction_forward.2} parent=23 // pred_check_branch
        %233 = sbr.rel (%p231) target = $region36
      $region35: #{fixed_reduction_forward.2} parent=23 // pred_region
        _
      $region36: #{fixed_reduction_forward.2} parent=23 // pred_fallthru
        _
    $region24: #{fixed_reduction_forward.2} parent=5 // pred_fallthru
      _
    %p234 = scmp.le.s32.totalorder 2, %s9
    // Predicated region
    $region37: #{fixed_reduction_forward.2} parent=5 // pred_check
      %p235 = pneg %p234
    $region38: #{fixed_reduction_forward.2} parent=5 // pred_check_branch
      %237 = sbr.rel (%p235) target = $region40
    $region39: #{fixed_reduction_forward.2} parent=5 // pred_region
      %s238 = ssub.s32 %s9, 2
      // Predicated region
      $region41: #{fixed_reduction_forward.2} parent=39 // pred_check
        %p239 = pneg %p78
      $region42: #{fixed_reduction_forward.2} parent=39 // pred_check_branch
        %241 = sbr.rel (%p239) target = $region44
      $region43: #{fixed_reduction_forward.2} parent=39 // pred_region
        %p242 = scmp.lt.s32.totalorder %s20, 1
        %s243 = scalar_select %p242, %s20, 1
        %s244 = smul.addr %s243, 4
        %s245 = scalar_lea.vmem %s1, %s244
      $region44: #{fixed_reduction_forward.2} parent=39 // pred_fallthru
        _
      // Predicated region
      $region45: #{fixed_reduction_forward.2} parent=39 // pred_check
        %p246 = pneg %p104
      $region46: #{fixed_reduction_forward.2} parent=39 // pred_check_branch
        %248 = sbr.rel (%p246) target = $region48
      $region47: #{fixed_reduction_forward.2} parent=39 // pred_region
        %p249 = scmp.lt.s32.totalorder %s20, 1
        %s250 = scalar_select %p249, %s20, 1
        %s251 = smul.addr %s250, 4
        %s252 = scalar_lea.vmem %s2, %s251
      $region48: #{fixed_reduction_forward.2} parent=39 // pred_fallthru
        _
    $region40: #{fixed_reduction_forward.2} parent=5 // pred_fallthru
      _
  $region6: #{fixed_reduction_forward.2} parent=0 // loop_footer
    %s13 = sadd.s32 1, %s9
  $region7: #{fixed_reduction_forward.2} parent=0 // loop_footer_branch
    %8 = sbr.rel target = $region3
  $region8: #{fixed_reduction_forward.2} parent=0 // loop_exit
    _

</llo_original>
